<compile_context>
chip_gen: v5e
topology: v5e:2x2
jax: 0.10.0
libtpu: 0.0.40
codegen_flags: <defaults>
</compile_context>

<pallas_src>
import jax
import jax.numpy as jnp
from jax.experimental import pallas as pl
from jax.experimental.pallas import tpu as pltpu

_SMALL_BYTES = 4 << 20      # below this output size, XLA concat wins (launch overhead)
_MIN_GRID_STEPS = 8         # keep the DMA pipeline busy + feed both v7x TCs
_LANE = 128


def _vmem_budgets():
    """(per-step block-data budget, scoped vmem limit) per TPU generation."""
    try:
        cap = int(pltpu.get_tpu_info().vmem_capacity_bytes)
    except Exception:
        cap = 64 << 20                     # conservative default (v7x per-TC)
    if cap >= (96 << 20):                  # v5e / v6e: 128 MiB physical VMEM
        return 24 << 20, 64 << 20
    return 16 << 20, 32 << 20              # v7x: 64 MiB physical, 32 MiB scoped


def _sublane_multiple(dtype) -> int:
    """Minimum sublane tile for a packed dtype (8 f32, 16 bf16, 32 int8)."""
    itemsize = jnp.dtype(dtype).itemsize
    return max(8, 32 // max(1, itemsize))


def _make_cat_kernel(sizes, offsets):
    """Copy each input tile into its static lane slab of the output tile."""

    def kernel(*refs):
        *in_refs, out_ref = refs
        for r, o, s in zip(in_refs, offsets, sizes):
            # Static lane slice -> plain vector stores (unmasked when o and s
            # are 128-aligned, which the dispatcher guarantees on the perf
            # path).  The cast is fused into the DMA-bound copy so promoted
            # inputs do not pay an extra HBM pass.
            out_ref[:, o:o + s] = r[...].astype(out_ref.dtype)

    return kernel


def cat_layer(*xs, force_kernel: bool = False):
    """JAX/Pallas equivalent of CatLayer.forward (torch.cat(..., -1)).

    Accepts either a single list/tuple of arrays or multiple array args.
    """
    if len(xs) == 1 and isinstance(xs[0], (list, tuple)):
        xs = tuple(xs[0])
    xs = tuple(xs)

    if len(xs) == 1:
        return xs[0]

    lead_shape = xs[0].shape[:-1]
    for x in xs:
        assert x.shape[:-1] == lead_shape, "leading dims must match for cat(-1)"

    # TODO(synk): jnp.result_type may differ from torch.cat promotion for some
    # exotic mixed int/float combos; identical for the float dtypes seen here.
    out_dtype = jnp.result_type(*[x.dtype for x in xs])
    out_itemsize = jnp.dtype(out_dtype).itemsize
    sizes = [int(x.shape[-1]) for x in xs]
    offsets, off = [], 0
    for s in sizes:
        offsets.append(off)
        off += s
    d_total = off

    m = 1
    for d in lead_shape:
        m *= int(d)

    needs_cast = any(x.dtype != out_dtype for x in xs)
    out_bytes = m * d_total * out_itemsize
    # Lane-aligned offsets + total -> every kernel store is an unmasked vst.
    lane_aligned = (d_total % _LANE == 0) and all(o % _LANE == 0 for o in offsets)

    block_budget, vmem_limit = _vmem_budgets()
    in_row_bytes = sum(s * jnp.dtype(x.dtype).itemsize for x, s in zip(xs, sizes))
    per_row_bytes = 2 * (d_total * out_itemsize + in_row_bytes)   # double-buffered
    sublane = max(_sublane_multiple(out_dtype),
                  *[_sublane_multiple(x.dtype) for x in xs])
    min_block_bytes = sublane * per_row_bytes   # smallest legal per-step footprint

    use_kernel = force_kernel or (
        needs_cast                       # same-dtype pure copy: XLA concat wins
        and lane_aligned                 # avoid masked vst.msk on the store slot
        and out_bytes >= _SMALL_BYTES    # amortize launch + pipeline warm-up
        and min_block_bytes <= vmem_limit  # degenerate very-wide-row guard
    )
    if not use_kernel:
        return jnp.concatenate([x.astype(out_dtype) for x in xs], axis=-1)

    if min_block_bytes > vmem_limit:     # only reachable via force_kernel
        vmem_limit = min_block_bytes + (4 << 20)

    # Row tile: as big as the VMEM budget allows, but small enough to give
    # >= ~_MIN_GRID_STEPS grid steps (pipelining + v7x dual-TC split), and no
    # bigger than the (sublane-rounded) row count.
    tm = block_budget // max(1, per_row_bytes)
    tm_steps = m // _MIN_GRID_STEPS
    if tm_steps >= sublane:
        tm = min(tm, tm_steps)
    tm = max(sublane, (tm // sublane) * sublane)
    tm = min(tm, 8192)
    tm = min(tm, max(sublane, ((m + sublane - 1) // sublane) * sublane))

    # 2-D row views; concat axis stays on lanes.  No wrapper-side dtype cast.
    xs2d = [jnp.reshape(x, (m, s)) for x, s in zip(xs, sizes)]
    kernel = _make_cat_kernel(sizes, offsets)

    out2d = pl.pallas_call(
        kernel,
        out_shape=jax.ShapeDtypeStruct((m, d_total), out_dtype),
        grid=(pl.cdiv(m, tm),),
        in_specs=[pl.BlockSpec((tm, s), lambda i: (i, 0)) for s in sizes],
        out_specs=pl.BlockSpec((tm, d_total), lambda i: (i, 0)),
        compiler_params=pltpu.CompilerParams(
            dimension_semantics=("parallel",),   # shard rows across v7x's 2 TCs
            vmem_limit_bytes=vmem_limit,
        ),
    )(*xs2d)

    return jnp.reshape(out2d, lead_shape + (d_total,))


if __name__ == "__main__":
    key = jax.random.PRNGKey(0)
    k1, k2, k3, k4, k5 = jax.random.split(key, 5)

    # Small shapes consistent with the module: batch=2, seq=8, hidden 32/32/64.
    x1 = jax.random.normal(k1, (2, 8, 32), dtype=jnp.float32)
    x2 = jax.random.normal(k2, (2, 8, 32), dtype=jnp.float32)
    x3 = jax.random.normal(k3, (2, 8, 64), dtype=jnp.float32)

    # Exercise the Pallas kernel directly (small / same-dtype inputs would
    # normally short-circuit to the XLA-concat fast path).
    out_a = cat_layer(x1, x2, x3, force_kernel=True)
    # List call-style (as in CatLayer.forward); dispatcher picks XLA concat.
    out_b = cat_layer([x1, x2, x3])
    jax.block_until_ready(out_a)
    jax.block_until_ready(out_b)

    ref = jnp.concatenate([x1, x2, x3], axis=-1)
    assert out_a.shape == (2, 8, 128), out_a.shape
    assert out_b.shape == (2, 8, 128), out_b.shape
    assert jnp.allclose(out_a, ref), "mismatch vs jnp.concatenate (kernel path)"
    assert jnp.allclose(out_b, ref), "mismatch vs jnp.concatenate (list path)"

    # Mixed-dtype, lane-aligned case: exercises the kernel's fused bf16->f32
    # cast and the multi-step (>= 8) pipelined grid.
    y1 = jax.random.normal(k4, (4, 256, 128), dtype=jnp.float32)
    y2 = jax.random.normal(k5, (4, 256, 384), dtype=jnp.bfloat16)
    out_c = cat_layer(y1, y2, force_kernel=True)
    jax.block_until_ready(out_c)
    ref_c = jnp.concatenate([y1, y2.astype(jnp.float32)], axis=-1)
    assert out_c.dtype == jnp.float32
    assert out_c.shape == (4, 256, 512), out_c.shape
    assert jnp.allclose(out_c, ref_c), "mismatch vs jnp.concatenate (mixed dtype)"

    # Auto-dispatch on the same mixed-dtype inputs (small -> XLA fallback path).
    out_d = cat_layer(y1, y2)
    jax.block_until_ready(out_d)
    assert jnp.allclose(out_d, ref_c), "mismatch vs jnp.concatenate (auto path)"

    print("KERNEL_OK")
</pallas_src>

<mosaic_0001>
module attributes {stable_mosaic.version = 11 : i64} {
  func.func @kernel(%arg0: i32, %arg1: memref<16x32xf32, #tpu.memory_space<vmem>>, %arg2: memref<16x32xf32, #tpu.memory_space<vmem>>, %arg3: memref<16x64xf32, #tpu.memory_space<vmem>>, %arg4: memref<16x128xf32, #tpu.memory_space<vmem>>) attributes {dimension_semantics = [#tpu.dimension_semantics<parallel>], iteration_bounds = array<i64: 1>, scalar_prefetch = 0 : i64, scratch_operands = 0 : i64, tpu.core_type = #tpu.core_type<tc>, window_params = [{transform_indices = @transform_0, window_bounds = array<i64: 16, 32>}, {transform_indices = @transform_1, window_bounds = array<i64: 16, 32>}, {transform_indices = @transform_2, window_bounds = array<i64: 16, 64>}, {transform_indices = @transform_3, window_bounds = array<i64: 16, 128>}]} {
    %c0 = arith.constant 0 : index
    %c0_0 = arith.constant 0 : index
    %0 = vector.load %arg1[%c0, %c0_0] : memref<16x32xf32, #tpu.memory_space<vmem>>, vector<16x32xf32>
    %c0_1 = arith.constant 0 : index
    %c0_2 = arith.constant 0 : index
    %1 = vector.load %arg4[%c0_1, %c0_2] : memref<16x128xf32, #tpu.memory_space<vmem>>, vector<16x32xf32>
    tpu.vector_store %arg4[%c0_1, %c0_2], %0 {strides = array<i32>} : memref<16x128xf32, #tpu.memory_space<vmem>>, vector<16x32xf32>,
    %c0_3 = arith.constant 0 : index
    %c0_4 = arith.constant 0 : index
    %2 = vector.load %arg2[%c0_3, %c0_4] : memref<16x32xf32, #tpu.memory_space<vmem>>, vector<16x32xf32>
    %c0_5 = arith.constant 0 : index
    %c32 = arith.constant 32 : index
    %3 = vector.load %arg4[%c0_5, %c32] : memref<16x128xf32, #tpu.memory_space<vmem>>, vector<16x32xf32>
    tpu.vector_store %arg4[%c0_5, %c32], %2 {strides = array<i32>} : memref<16x128xf32, #tpu.memory_space<vmem>>, vector<16x32xf32>,
    %c0_6 = arith.constant 0 : index
    %c0_7 = arith.constant 0 : index
    %4 = vector.load %arg3[%c0_6, %c0_7] : memref<16x64xf32, #tpu.memory_space<vmem>>, vector<16x64xf32>
    %c0_8 = arith.constant 0 : index
    %c64 = arith.constant 64 : index
    %5 = vector.load %arg4[%c0_8, %c64] : memref<16x128xf32, #tpu.memory_space<vmem>>, vector<16x64xf32>
    tpu.vector_store %arg4[%c0_8, %c64], %4 {strides = array<i32>} : memref<16x128xf32, #tpu.memory_space<vmem>>, vector<16x64xf32>,
    return
  }
  func.func @transform_0(%arg0: i32) -> (i32, i32) {
    %c0_i32 = arith.constant 0 : i32
    %c0_i32_0 = arith.constant 0 : i32
    return %arg0, %c0_i32 : i32, i32
  }
  func.func @transform_1(%arg0: i32) -> (i32, i32) {
    %c0_i32 = arith.constant 0 : i32
    %c0_i32_0 = arith.constant 0 : i32
    return %arg0, %c0_i32 : i32, i32
  }
  func.func @transform_2(%arg0: i32) -> (i32, i32) {
    %c0_i32 = arith.constant 0 : i32
    %c0_i32_0 = arith.constant 0 : i32
    return %arg0, %c0_i32 : i32, i32
  }
  func.func @transform_3(%arg0: i32) -> (i32, i32) {
    %c0_i32 = arith.constant 0 : i32
    %c0_i32_0 = arith.constant 0 : i32
    return %arg0, %c0_i32 : i32, i32
  }
}

</mosaic_0001>

<llo_original>
// kernel: tpu_custom_call.1
$region0: #{tpu_custom_call.1}
  #allocation0 [shape = 'u32[]', space=smem, size = 0x4, offset = 0x4, fixed_abs, tag = 'smem constant byte address 0x4 - core index']
  #allocation1 [shape = 'u32[72,128]{1,0:T(1,128)}', space=vmem, size = 0x9000, scoped, tag = 'internal scratch']
  %s0 = inlined_call_operand.hbm [shape: f32[16,32], index: 0, kind: input, shape index: {}]
  %s1 = inlined_call_operand.hbm [shape: f32[16,32], index: 1, kind: input, shape index: {}]
  %s2 = inlined_call_operand.hbm [shape: f32[16,64], index: 2, kind: input, shape index: {}]
  %s3 = inlined_call_operand.hbm [shape: f32[16,128], index: 3, kind: output, shape index: {}]
  %s4 = sld [smem:[#allocation0]]
  $region34: #{tpu_custom_call.1} parent=0
    _
  %s6 = ssub.s32 1, %s4
  %s7 = scalar_select 0, %s6, %s4
  $region1: #{tpu_custom_call.1} parent=0
    #allocation2 [shape = 'u8[8192]{0}', space=vmem, size = 0x2000, scoped, tag = 'input window, operand 0, single buffered']
    #allocation3 [shape = 's32[1]{0}', space=sflag, size = 0x4, scoped, tag = 'scoped memory for tpu_custom_call.1']
    #allocation4 [shape = 's32[1]{0}', space=sflag, size = 0x4, scoped, tag = 'scoped memory for tpu_custom_call.1']
    #allocation5 [shape = 'u8[8192]{0}', space=vmem, size = 0x2000, scoped, tag = 'input window, operand 1, single buffered']
    #allocation6 [shape = 's32[1]{0}', space=sflag, size = 0x4, scoped, tag = 'scoped memory for tpu_custom_call.1']
    #allocation7 [shape = 'u8[8192]{0}', space=vmem, size = 0x2000, scoped, tag = 'input window, operand 2, single buffered']
    #allocation8 [shape = 'u8[8192]{0}', space=vmem, size = 0x2000, scoped, tag = 'output window, operand 0, single buffered']
    %8 = vsyncpa [#allocation3], 0
    %9 = vsyncpa [#allocation6], 0
    %10 = vsyncpa [#allocation4], 0
    // Predicated region
    $region2: #{tpu_custom_call.1} parent=1 // pred_check
      _
    $region3: #{tpu_custom_call.1} parent=1 // pred_check_branch
      %12 = sbr.rel (0) target = $region5
    $region4: #{tpu_custom_call.1} parent=1 // pred_region
      %14 = vsyncadd [#allocation3], 0
      %s15 = sshll.u32 %s0, 4
      %s16 = int_to_ptr.hbm [resolvable:$true] %s15
      %s17 = sshll.u32 [#allocation2], 4
      %s18 = int_to_ptr.vmem [resolvable:$true] %s17
      %23 = dma.hbm_to_vmem [thread:$0]  %s16, 256, %s18, [#allocation3], 128, 128, 8
    $region5: #{tpu_custom_call.1} parent=1 // pred_fallthru
      _
    // Predicated region
    $region6: #{tpu_custom_call.1} parent=1 // pred_check
      _
    $region7: #{tpu_custom_call.1} parent=1 // pred_check_branch
      %25 = sbr.rel (0) target = $region9
    $region8: #{tpu_custom_call.1} parent=1 // pred_region
      %27 = vsyncadd [#allocation6], 0
      %s28 = sshll.u32 %s1, 4
      %s29 = int_to_ptr.hbm [resolvable:$true] %s28
      %s30 = sshll.u32 [#allocation5], 4
      %s31 = int_to_ptr.vmem [resolvable:$true] %s30
      %36 = dma.hbm_to_vmem [thread:$0]  %s29, 256, %s31, [#allocation6], 128, 128, 8
    $region9: #{tpu_custom_call.1} parent=1 // pred_fallthru
      _
    // Predicated region
    $region10: #{tpu_custom_call.1} parent=1 // pred_check
      _
    $region11: #{tpu_custom_call.1} parent=1 // pred_check_branch
      %38 = sbr.rel (0) target = $region13
    $region12: #{tpu_custom_call.1} parent=1 // pred_region
      %40 = vsyncadd [#allocation6], 0
      %s41 = sshll.u32 %s2, 4
      %s42 = int_to_ptr.hbm [resolvable:$true] %s41
      %s43 = sshll.u32 [#allocation7], 4
      %s44 = int_to_ptr.vmem [resolvable:$true] %s43
      %49 = dma.hbm_to_vmem [thread:$0]  %s42, 256, %s44, [#allocation6], 128, 128, 8
    $region13: #{tpu_custom_call.1} parent=1 // pred_fallthru
      _
    // Predicated region
    $region14: #{tpu_custom_call.1} parent=1 // pred_check
      _
    $region15: #{tpu_custom_call.1} parent=1 // pred_check_branch
      %51 = sbr.rel (0) target = $region17
    $region16: #{tpu_custom_call.1} parent=1 // pred_region
      %53 = dma.done [#allocation3], 256
    $region17: #{tpu_custom_call.1} parent=1 // pred_fallthru
      _
    // Predicated region
    $region18: #{tpu_custom_call.1} parent=1 // pred_check
      _
    $region19: #{tpu_custom_call.1} parent=1 // pred_check_branch
      %55 = sbr.rel (0) target = $region21
    $region20: #{tpu_custom_call.1} parent=1 // pred_region
      %57 = dma.done [#allocation6], 256
    $region21: #{tpu_custom_call.1} parent=1 // pred_fallthru
      _
    // Predicated region
    $region22: #{tpu_custom_call.1} parent=1 // pred_check
      _
    $region23: #{tpu_custom_call.1} parent=1 // pred_check_branch
      %59 = sbr.rel (0) target = $region25
    $region24: #{tpu_custom_call.1} parent=1 // pred_region
      %61 = dma.done [#allocation6], 256
    $region25: #{tpu_custom_call.1} parent=1 // pred_fallthru
      _
    %v62 = vld [vmem:[#allocation2] sm:$0xff]
    %v63 = vld [vmem:[#allocation2 + $0x8] sm:$0xff]
    %vm64 = vcmask 261120
    %65 = vst.msk [vmem:[#allocation8] sm:$0xff] %vm64, %v62
    %66 = vst.msk [vmem:[#allocation8 + $0x8] sm:$0xff] %vm64, %v63
    %v67 = vld [vmem:[#allocation5] sm:$0xff]
    %v68 = vld [vmem:[#allocation5 + $0x8] sm:$0xff]
    %71 = vrot.lane.b32.xlu0 %v67, 32
    %v72 = vpop.permute.xlu0 %71
    %73 = vrot.lane.b32.xlu0 %v68, 32
    %v74 = vpop.permute.xlu0 %73
    %vm77 = vcmask 523520
    %78 = vst.msk [vmem:[#allocation8] sm:$0xff] %vm77, %v72
    %79 = vst.msk [vmem:[#allocation8 + $0x8] sm:$0xff] %vm77, %v74
    %v80 = vld [vmem:[#allocation7] sm:$0xff]
    %v81 = vld [vmem:[#allocation7 + $0x8] sm:$0xff]
    %84 = vrot.lane.b32.xlu0 %v80, 64
    %v85 = vpop.permute.xlu0 %84
    %86 = vrot.lane.b32.xlu0 %v81, 64
    %v87 = vpop.permute.xlu0 %86
    %vm90 = vcmask 1048064
    %91 = vst.msk [vmem:[#allocation8] sm:$0xff] %vm90, %v85
    %92 = vst.msk [vmem:[#allocation8 + $0x8] sm:$0xff] %vm90, %v87
    // Predicated region
    $region26: #{tpu_custom_call.1} parent=1 // pred_check
      _
    $region27: #{tpu_custom_call.1} parent=1 // pred_check_branch
      %94 = sbr.rel (0) target = $region29
    $region28: #{tpu_custom_call.1} parent=1 // pred_region
      %96 = vsyncadd [#allocation4], 0
      %s97 = sshll.u32 [#allocation8], 4
      %s98 = int_to_ptr.vmem [resolvable:$true] %s97
      %s99 = sshll.u32 %s3, 4
      %s100 = int_to_ptr.hbm [resolvable:$true] %s99
      %105 = dma.vmem_to_hbm [thread:$0]  %s98, 256, %s100, [#allocation4], 128, 128, 8
    $region29: #{tpu_custom_call.1} parent=1 // pred_fallthru
      _
    // Predicated region
    $region30: #{tpu_custom_call.1} parent=1 // pred_check
      _
    $region31: #{tpu_custom_call.1} parent=1 // pred_check_branch
      %107 = sbr.rel (0) target = $region33
    $region32: #{tpu_custom_call.1} parent=1 // pred_region
      %109 = dma.done [#allocation4], 256
    $region33: #{tpu_custom_call.1} parent=1 // pred_fallthru
      _
    %110 = vsyncpa [#allocation3], 1
    %111 = vsyncpa [#allocation6], 1
    %112 = vsyncpa [#allocation4], 1

</llo_original>
